<compile_context>
chip_gen: v5e
topology: v5e:2x2
jax: 0.10.0
libtpu: 0.0.40
codegen_flags: <defaults>
</compile_context>

<pallas_src>
import jax
import jax.numpy as jnp
from jax.experimental import pallas as pl
from jax.experimental.pallas import tpu as pltpu

LANE = 128

# ---- single-shot (gridless) path: everything resident in VMEM at once ------
SMALL_VMEM_BYTES = 12 << 20      # padded-footprint budget to take this path
SMALL_VMEM_LIMIT = 32 << 20      # scoped VMEM limit requested for it

# ---- tiled slab fallback (very large inputs only) ---------------------------
MAX_TILE_M = 2048                # 2048 x 128 f32 = 1 MiB per block
SPLIT_MIN_ROWS = 8192            # rows per TC before a 2-way split pays off


def _round_up(x, m):
    return ((x + m - 1) // m) * m


def _lane_dense_2d_shape(n, orig_shape):
    """Pick a free (bitcast) 2D reshape that keeps lanes dense when possible."""
    if n % LANE == 0:
        return (n // LANE, LANE)
    if n % 8 == 0:
        return (8, n // 8)
    return (1, n)


# -----------------------------------------------------------------------------
# Path A: one gridless pallas_call, each layer a full-array VMEM ref.
# -----------------------------------------------------------------------------
def _small_loss(layers, shapes2d):
    inv_ns = [1.0 / float(int(x.size)) for x in layers]
    xs = [x.reshape(shp) for x, shp in zip(layers, shapes2d)]  # metadata-only

    def kernel(*refs):
        o_ref = refs[-1]
        total = jnp.zeros((), dtype=jnp.float32)
        for x_ref, inv_n in zip(refs[:-1], inv_ns):
            # Upcast (if needed) inside the kernel, after the HBM->VMEM DMA.
            d = x_ref[...].astype(jnp.float32) - jnp.float32(1.0)
            total = total + jnp.sum(d * d) * jnp.float32(inv_n)
        o_ref[0, 0] = total

    out = pl.pallas_call(
        kernel,
        out_shape=jax.ShapeDtypeStruct((1, 1), jnp.float32),
        in_specs=[pl.BlockSpec(memory_space=pltpu.VMEM)] * len(xs),
        out_specs=pl.BlockSpec(memory_space=pltpu.SMEM),
        compiler_params=pltpu.CompilerParams(
            vmem_limit_bytes=SMALL_VMEM_LIMIT),
    )(*xs)
    return out[0, 0]


# -----------------------------------------------------------------------------
# Path B: tiled slab fallback for very large inputs.
# -----------------------------------------------------------------------------
def _slab_kernel(y_ref, o_ref, acc_ref):
    # Grid is (split, steps) with `steps` innermost, so each split runs its
    # full k range contiguously and the init/finalize gating below is valid.
    k = pl.program_id(1)

    @pl.when(k == 0)
    def _():
        acc_ref[...] = jnp.zeros_like(acc_ref)

    y = y_ref[...]                      # already scaled by 1/sqrt(n) per layer
    sq = y * y
    tm = y_ref.shape[0]                 # multiple of 8 by construction
    # Layout-preserving (8,128)-tile-aligned reshape; axis-0 sum is pure
    # vreg-wise VPU adds into a single-vreg accumulator.
    acc_ref[...] += sq.reshape(tm // 8, 8, LANE).sum(axis=0)

    @pl.when(k == pl.num_programs(1) - 1)
    def _():
        # Single cross-lane reduce per split, written to the SMEM scalar slot.
        o_ref[0, 0] = jnp.sum(acc_ref[...])


def _slab_loss(layers):
    # Fold the per-layer constant into the (only) prep pass:
    #   y = (x - 1) / sqrt(n), padded with 0  =>  sum(y*y) == sum of means.
    parts = []
    for x in layers:
        n = int(x.size)
        scale = 1.0 / (float(n) ** 0.5)
        y = (jnp.ravel(x).astype(jnp.float32) - 1.0) * jnp.float32(scale)
        rows = _round_up(n, LANE) // LANE
        y = jnp.pad(y, (0, rows * LANE - n))
        parts.append(y.reshape(rows, LANE))
    y2d = jnp.concatenate(parts, axis=0)

    rows = y2d.shape[0]
    # Only split across TensorCores when each split gets meaningful work
    # (pure overhead on single-TC v5e/v6e and for small inputs on v7x).
    n_split = 2 if rows >= 2 * SPLIT_MIN_ROWS else 1
    per_split = pl.cdiv(rows, n_split)
    # Rebalance rows across steps instead of padding out a whole extra tile.
    steps = pl.cdiv(per_split, MAX_TILE_M)
    tile_m = _round_up(pl.cdiv(per_split, steps), 8)
    total_rows = n_split * steps * tile_m
    if total_rows != rows:
        y2d = jnp.pad(y2d, ((0, total_rows - rows), (0, 0)))  # zeros: no-op

    partials = pl.pallas_call(
        _slab_kernel,
        out_shape=jax.ShapeDtypeStruct((n_split, 1), jnp.float32),
        grid_spec=pltpu.PrefetchScalarGridSpec(
            num_scalar_prefetch=0,
            grid=(n_split, steps),
            in_specs=[
                pl.BlockSpec((tile_m, LANE), lambda i, k: (i * steps + k, 0)),
            ],
            out_specs=pl.BlockSpec((1, 1), lambda i, k: (i, 0),
                                   memory_space=pltpu.SMEM),
            scratch_shapes=[pltpu.VMEM((8, LANE), jnp.float32)],
        ),
        compiler_params=pltpu.CompilerParams(
            dimension_semantics=("parallel", "arbitrary")),
    )(y2d)
    return jnp.sum(partials)


# -----------------------------------------------------------------------------
# Dispatch + module-equivalent wrapper.
# -----------------------------------------------------------------------------
def _fused_mse_vs_ones(layers):
    """sum_l mean((layer_l - 1)^2) over all layers."""
    # Guard: empty layers would give 1/0; PyTorch would produce nan anyway.
    layers = [x for x in layers if int(x.size) > 0]
    if not layers:
        return jnp.float32(0.0)

    shapes2d = []
    vmem_bytes = 0
    for x in layers:
        n = int(x.size)
        shp = _lane_dense_2d_shape(n, x.shape)
        shapes2d.append(shp)
        r, c = shp
        vmem_bytes += _round_up(r, 8) * _round_up(c, LANE) * 4  # conservative

    if vmem_bytes <= SMALL_VMEM_BYTES:
        return _small_loss(layers, shapes2d)
    return _slab_loss(layers)


def lsgan_g_loss(batch_data):
    """Pallas-backed equivalent of LSGAN_G_Loss.forward."""
    layers = [layer_logits
              for logits in batch_data['predicted_fake_logits']
              for layer_logits in logits]
    batch_data['loss_G'] = _fused_mse_vs_ones(layers)
    return batch_data


if __name__ == "__main__":
    key = jax.random.PRNGKey(0)

    # Synthetic multi-scale discriminator outputs:
    # 2 discriminators, each emitting a list of per-layer logits (NCHW).
    layer_shapes = [
        [(2, 4, 16, 16), (2, 8, 8, 8), (2, 1, 4, 4)],   # discriminator 0
        [(2, 4, 8, 8), (2, 1, 4, 4)],                   # discriminator 1
    ]

    predicted_fake_logits = []
    for disc_shapes in layer_shapes:
        layers = []
        for shp in disc_shapes:
            key, sub = jax.random.split(key)
            layers.append(jax.random.normal(sub, shp, dtype=jnp.float32))
        predicted_fake_logits.append(layers)

    batch_data = {'predicted_fake_logits': predicted_fake_logits}

    out = lsgan_g_loss(batch_data)
    loss = jax.block_until_ready(out['loss_G'])

    # Pure-JAX reference.
    ref = jnp.float32(0.0)
    for logits in predicted_fake_logits:
        for layer_logits in logits:
            ref = ref + jnp.mean((layer_logits - 1.0) ** 2)
    ref = jax.block_until_ready(ref)

    assert jnp.allclose(loss, ref, rtol=1e-5, atol=1e-5), (loss, ref)

    # Also exercise the large-input slab fallback on the same data.
    flat_layers = [l for logits in predicted_fake_logits for l in logits]
    slab = jax.block_until_ready(_slab_loss(flat_layers))
    assert jnp.allclose(slab, ref, rtol=1e-5, atol=1e-5), (slab, ref)

    print("KERNEL_OK")
</pallas_src>

<mosaic_0001>
module attributes {stable_mosaic.version = 11 : i64} {
  func.func @kernel(%arg0: memref<16x128xf32, #tpu.memory_space<vmem>>, %arg1: memref<8x128xf32, #tpu.memory_space<vmem>>, %arg2: memref<8x4xf32, #tpu.memory_space<vmem>>, %arg3: memref<4x128xf32, #tpu.memory_space<vmem>>, %arg4: memref<8x4xf32, #tpu.memory_space<vmem>>, %arg5: memref<1x1xf32, #tpu.memory_space<smem>>) attributes {dimension_semantics = [], scalar_prefetch = 0 : i64, scratch_operands = 0 : i64, tpu.core_type = #tpu.core_type<tc>} {
    %c0 = arith.constant 0 : index
    %c0_0 = arith.constant 0 : index
    %0 = vector.load %arg0[%c0, %c0_0] : memref<16x128xf32, #tpu.memory_space<vmem>>, vector<16x128xf32>
    %cst = arith.constant 1.000000e+00 : f32
    %1 = vector.broadcast %cst : f32 to vector<16x128xf32>
    %2 = arith.subf %0, %1 : vector<16x128xf32>
    %3 = arith.mulf %2, %2 : vector<16x128xf32>
    %4 = vector.shape_cast %3 : vector<16x128xf32> to vector<1x16x128xf32>
    %cst_1 = arith.constant dense<0.000000e+00> : vector<1xf32>
    %5 = vector.multi_reduction <add>, %4, %cst_1 [1, 2] : vector<1x16x128xf32> to vector<1xf32>
    %6 = vector.shape_cast %5 : vector<1xf32> to vector<1x1x1xf32>
    %7 = vector.extract %6[0, 0, 0] : f32 from vector<1x1x1xf32>
    %cst_2 = arith.constant 4.8828125E-4 : f32
    %8 = arith.mulf %7, %cst_2 : f32
    %cst_3 = arith.constant 0.000000e+00 : f32
    %9 = arith.addf %cst_3, %8 : f32
    %c0_4 = arith.constant 0 : index
    %c0_5 = arith.constant 0 : index
    %10 = vector.load %arg1[%c0_4, %c0_5] : memref<8x128xf32, #tpu.memory_space<vmem>>, vector<8x128xf32>
    %cst_6 = arith.constant 1.000000e+00 : f32
    %11 = vector.broadcast %cst_6 : f32 to vector<8x128xf32>
    %12 = arith.subf %10, %11 : vector<8x128xf32>
    %13 = arith.mulf %12, %12 : vector<8x128xf32>
    %14 = vector.shape_cast %13 : vector<8x128xf32> to vector<1x8x128xf32>
    %cst_7 = arith.constant dense<0.000000e+00> : vector<1xf32>
    %15 = vector.multi_reduction <add>, %14, %cst_7 [1, 2] : vector<1x8x128xf32> to vector<1xf32>
    %16 = vector.shape_cast %15 : vector<1xf32> to vector<1x1x1xf32>
    %17 = vector.extract %16[0, 0, 0] : f32 from vector<1x1x1xf32>
    %cst_8 = arith.constant 9.765625E-4 : f32
    %18 = arith.mulf %17, %cst_8 : f32
    %19 = arith.addf %9, %18 : f32
    %c0_9 = arith.constant 0 : index
    %c0_10 = arith.constant 0 : index
    %20 = vector.load %arg2[%c0_9, %c0_10] : memref<8x4xf32, #tpu.memory_space<vmem>>, vector<8x4xf32>
    %cst_11 = arith.constant 1.000000e+00 : f32
    %21 = vector.broadcast %cst_11 : f32 to vector<8x4xf32>
    %22 = arith.subf %20, %21 : vector<8x4xf32>
    %23 = arith.mulf %22, %22 : vector<8x4xf32>
    %24 = vector.shape_cast %23 : vector<8x4xf32> to vector<1x8x4xf32>
    %cst_12 = arith.constant dense<0.000000e+00> : vector<1xf32>
    %25 = vector.multi_reduction <add>, %24, %cst_12 [1, 2] : vector<1x8x4xf32> to vector<1xf32>
    %26 = vector.shape_cast %25 : vector<1xf32> to vector<1x1x1xf32>
    %27 = vector.extract %26[0, 0, 0] : f32 from vector<1x1x1xf32>
    %cst_13 = arith.constant 3.125000e-02 : f32
    %28 = arith.mulf %27, %cst_13 : f32
    %29 = arith.addf %19, %28 : f32
    %c0_14 = arith.constant 0 : index
    %c0_15 = arith.constant 0 : index
    %30 = vector.load %arg3[%c0_14, %c0_15] : memref<4x128xf32, #tpu.memory_space<vmem>>, vector<4x128xf32>
    %cst_16 = arith.constant 1.000000e+00 : f32
    %31 = vector.broadcast %cst_16 : f32 to vector<4x128xf32>
    %32 = arith.subf %30, %31 : vector<4x128xf32>
    %33 = arith.mulf %32, %32 : vector<4x128xf32>
    %34 = vector.shape_cast %33 : vector<4x128xf32> to vector<1x4x128xf32>
    %cst_17 = arith.constant dense<0.000000e+00> : vector<1xf32>
    %35 = vector.multi_reduction <add>, %34, %cst_17 [1, 2] : vector<1x4x128xf32> to vector<1xf32>
    %36 = vector.shape_cast %35 : vector<1xf32> to vector<1x1x1xf32>
    %37 = vector.extract %36[0, 0, 0] : f32 from vector<1x1x1xf32>
    %cst_18 = arith.constant 0.001953125 : f32
    %38 = arith.mulf %37, %cst_18 : f32
    %39 = arith.addf %29, %38 : f32
    %c0_19 = arith.constant 0 : index
    %c0_20 = arith.constant 0 : index
    %40 = vector.load %arg4[%c0_19, %c0_20] : memref<8x4xf32, #tpu.memory_space<vmem>>, vector<8x4xf32>
    %cst_21 = arith.constant 1.000000e+00 : f32
    %41 = vector.broadcast %cst_21 : f32 to vector<8x4xf32>
    %42 = arith.subf %40, %41 : vector<8x4xf32>
    %43 = arith.mulf %42, %42 : vector<8x4xf32>
    %44 = vector.shape_cast %43 : vector<8x4xf32> to vector<1x8x4xf32>
    %cst_22 = arith.constant dense<0.000000e+00> : vector<1xf32>
    %45 = vector.multi_reduction <add>, %44, %cst_22 [1, 2] : vector<1x8x4xf32> to vector<1xf32>
    %46 = vector.shape_cast %45 : vector<1xf32> to vector<1x1x1xf32>
    %47 = vector.extract %46[0, 0, 0] : f32 from vector<1x1x1xf32>
    %cst_23 = arith.constant 3.125000e-02 : f32
    %48 = arith.mulf %47, %cst_23 : f32
    %49 = arith.addf %39, %48 : f32
    %c0_24 = arith.constant 0 : index
    %c0_25 = arith.constant 0 : index
    %50 = memref.load %arg5[%c0_24, %c0_25] : memref<1x1xf32, #tpu.memory_space<smem>>
    memref.store %49, %arg5[%c0_24, %c0_25] : memref<1x1xf32, #tpu.memory_space<smem>>
    return
  }
}

</mosaic_0001>

<llo_original>
// kernel: tpu_custom_call.1
$region0: #{tpu_custom_call.1}
  #allocation0 [shape = 'u32[]', space=smem, size = 0x4, offset = 0x4, fixed_abs, tag = 'smem constant byte address 0x4 - core index']
  #allocation1 [shape = 'u32[72,128]{1,0:T(1,128)}', space=vmem, size = 0x9000, scoped, tag = 'internal scratch']
  %s0 = inlined_call_operand.vmem [shape: f32[16,128], index: 0, kind: input, shape index: {}]
  %s1 = inlined_call_operand.hbm [shape: f32[8,128], index: 1, kind: input, shape index: {}]
  %s2 = inlined_call_operand.vmem [shape: f32[8,4], index: 2, kind: input, shape index: {}]
  %s3 = inlined_call_operand.vmem [shape: f32[4,128], index: 3, kind: input, shape index: {}]
  %s4 = inlined_call_operand.vmem [shape: f32[8,4], index: 4, kind: input, shape index: {}]
  %s5 = inlined_call_operand.hbm [shape: f32[1,1], index: 5, kind: output, shape index: {}]
  %s6 = sld [smem:[#allocation0]]
  $region34: #{tpu_custom_call.1} parent=0
    _
  %s8 = ssub.s32 1, %s6
  %s9 = scalar_select 0, %s8, %s6
  $region1: #{tpu_custom_call.1} parent=0
    #allocation2 [shape = 'u8[4096]{0}', space=vmem, size = 0x1000, scoped, tag = 'input window, operand 1, single buffered']
    #allocation3 [shape = 's32[1]{0}', space=sflag, size = 0x4, scoped, tag = 'scoped memory for tpu_custom_call.1']
    #allocation4 [shape = 's32[1]{0}', space=sflag, size = 0x4, scoped, tag = 'scoped memory for tpu_custom_call.1']
    #allocation5 [shape = 'u8[512]{0}', space=smem, size = 0x200, scoped, tag = 'output window, operand 0, single buffered']
    %10 = vsyncpa [#allocation3], 0
    %11 = vsyncpa [#allocation4], 0
    // Predicated region
    $region2: #{tpu_custom_call.1} parent=1 // pred_check
      _
    $region3: #{tpu_custom_call.1} parent=1 // pred_check_branch
      %13 = sbr.rel (0) target = $region5
    $region4: #{tpu_custom_call.1} parent=1 // pred_region
      _
    $region5: #{tpu_custom_call.1} parent=1 // pred_fallthru
      _
    // Predicated region
    $region6: #{tpu_custom_call.1} parent=1 // pred_check
      _
    $region7: #{tpu_custom_call.1} parent=1 // pred_check_branch
      %15 = sbr.rel (0) target = $region9
    $region8: #{tpu_custom_call.1} parent=1 // pred_region
      %17 = vsyncadd [#allocation3], 0
      %s19 = sshll.u32 %s1, 4
      %s20 = int_to_ptr.hbm [resolvable:$true] %s19
      %s21 = sshll.u32 [#allocation2], 4
      %s22 = int_to_ptr.vmem [resolvable:$true] %s21
      %24 = dma.hbm_to_vmem [thread:$0]  %s20, 128, %s22, [#allocation3]
    $region9: #{tpu_custom_call.1} parent=1 // pred_fallthru
      _
    // Predicated region
    $region10: #{tpu_custom_call.1} parent=1 // pred_check
      _
    $region11: #{tpu_custom_call.1} parent=1 // pred_check_branch
      %26 = sbr.rel (0) target = $region13
    $region12: #{tpu_custom_call.1} parent=1 // pred_region
      _
    $region13: #{tpu_custom_call.1} parent=1 // pred_fallthru
      _
    // Predicated region
    $region14: #{tpu_custom_call.1} parent=1 // pred_check
      _
    $region15: #{tpu_custom_call.1} parent=1 // pred_check_branch
      %28 = sbr.rel (0) target = $region17
    $region16: #{tpu_custom_call.1} parent=1 // pred_region
      _
    $region17: #{tpu_custom_call.1} parent=1 // pred_fallthru
      _
    // Predicated region
    $region18: #{tpu_custom_call.1} parent=1 // pred_check
      _
    $region19: #{tpu_custom_call.1} parent=1 // pred_check_branch
      %30 = sbr.rel (0) target = $region21
    $region20: #{tpu_custom_call.1} parent=1 // pred_region
      _
    $region21: #{tpu_custom_call.1} parent=1 // pred_fallthru
      _
    // Predicated region
    $region22: #{tpu_custom_call.1} parent=1 // pred_check
      _
    $region23: #{tpu_custom_call.1} parent=1 // pred_check_branch
      %32 = sbr.rel (0) target = $region25
    $region24: #{tpu_custom_call.1} parent=1 // pred_region
      %34 = dma.done [#allocation3], 128
    $region25: #{tpu_custom_call.1} parent=1 // pred_fallthru
      _
    %v35 = vld [vmem:[%s0] sm:$0xff]
    %v36 = vld [vmem:[%s0 + $0x8] sm:$0xff]
    %v37 = vsub.f32 %v35, 1.0
    %v38 = vsub.f32 %v36, 1.0
    %v39 = vmul.f32 %v37, %v37
    %v40 = vmul.f32 %v38, %v38
    %v41 = vadd.f32 %v39, %v40
    %42 = vadd.xlane.f32.xlu0 %v41
    %v43 = vpop.xlane.xlu0 %42
    %v44 = vrot.slane %v43, 4
    %v45 = vadd.f32 %v43, %v44
    %v46 = vrot.slane %v45, 2
    %v47 = vadd.f32 %v45, %v46
    %v48 = vrot.slane %v47, 1
    %v49 = vadd.f32 %v47, %v48
    %s50 = vtos %v49
    %s51 = smul.f32 %s50, 0.00048828125
    %s52 = sadd.f32 %s51, 0.0
    %v53 = vld [vmem:[#allocation2] sm:$0xff]
    %v54 = vsub.f32 %v53, 1.0
    %v55 = vmul.f32 %v54, %v54
    %56 = vadd.xlane.f32.xlu0 %v55
    %v57 = vpop.xlane.xlu0 %56
    %v58 = vrot.slane %v57, 4
    %v59 = vadd.f32 %v57, %v58
    %v60 = vrot.slane %v59, 2
    %v61 = vadd.f32 %v59, %v60
    %v62 = vrot.slane %v61, 1
    %v63 = vadd.f32 %v61, %v62
    %s64 = vtos %v63
    %s65 = smul.f32 %s64, 0.0009765625
    %s66 = sadd.f32 %s52, %s65
    %v67 = vld [vmem:[%s2] sm:$0xff]
    %v68 = vsub.f32 %v67, 1.0
    %v69 = vmul.f32 %v68, %v68
    %vm70 = vcmask 31744
    %v71 = vsel %vm70, %v69, 0.0
    %72 = vadd.xlane.f32.xlu0 %v71
    %v73 = vpop.xlane.xlu0 %72
    %v74 = vrot.slane %v73, 4
    %v75 = vadd.f32 %v73, %v74
    %v76 = vrot.slane %v75, 2
    %v77 = vadd.f32 %v75, %v76
    %v78 = vrot.slane %v77, 1
    %v79 = vadd.f32 %v77, %v78
    %s80 = vtos %v79
    %s81 = smul.f32 %s80, 0.03125
    %s82 = sadd.f32 %s66, %s81
    %v83 = vld [vmem:[%s3] sm:$0xf]
    %v84 = vsub.f32 %v83, 1.0
    %v85 = vmul.f32 %v84, %v84
    %vm86 = vcmask 1043456
    %v87 = vsel %vm86, %v85, 0.0
    %88 = vadd.xlane.f32.xlu0 %v87
    %v89 = vpop.xlane.xlu0 %88
    %v90 = vrot.slane %v89, 4
    %v91 = vadd.f32 %v89, %v90
    %v92 = vrot.slane %v91, 2
    %v93 = vadd.f32 %v91, %v92
    %v94 = vrot.slane %v93, 1
    %v95 = vadd.f32 %v93, %v94
    %s96 = vtos %v95
    %s97 = smul.f32 %s96, 0.001953125
    %s98 = sadd.f32 %s82, %s97
    %v99 = vld [vmem:[%s4] sm:$0xff]
    %v100 = vsub.f32 %v99, 1.0
    %v101 = vmul.f32 %v100, %v100
    %v102 = vsel %vm70, %v101, 0.0
    %103 = vadd.xlane.f32.xlu0 %v102
    %v104 = vpop.xlane.xlu0 %103
    %v105 = vrot.slane %v104, 4
    %v106 = vadd.f32 %v104, %v105
    %v107 = vrot.slane %v106, 2
    %v108 = vadd.f32 %v106, %v107
    %v109 = vrot.slane %v108, 1
    %v110 = vadd.f32 %v108, %v109
    %s111 = vtos %v110
    %s112 = smul.f32 %s111, 0.03125
    %s113 = sadd.f32 %s98, %s112
    %s114 = scalar_lea.smem [#allocation5], 0
    %115 = sst [smem:[%s114]] %s113
    // Predicated region
    $region26: #{tpu_custom_call.1} parent=1 // pred_check
      _
    $region27: #{tpu_custom_call.1} parent=1 // pred_check_branch
      %117 = sbr.rel (0) target = $region29
    $region28: #{tpu_custom_call.1} parent=1 // pred_region
      %119 = vsyncadd [#allocation4], 0
      %s121 = sshll.u32 %s5, 4
      %s122 = int_to_ptr.hbm [resolvable:$true] %s121
      %124 = dma.smem_to_hbm [#allocation5], 16, %s122, [#allocation4]
    $region29: #{tpu_custom_call.1} parent=1 // pred_fallthru
      _
    // Predicated region
    $region30: #{tpu_custom_call.1} parent=1 // pred_check
      _
    $region31: #{tpu_custom_call.1} parent=1 // pred_check_branch
      %126 = sbr.rel (0) target = $region33
    $region32: #{tpu_custom_call.1} parent=1 // pred_region
      %128 = dma.done [#allocation4], 16
    $region33: #{tpu_custom_call.1} parent=1 // pred_fallthru
      _
    %129 = sfence
    %130 = vsyncpa [#allocation3], 1
    %131 = vsyncpa [#allocation4], 1

</llo_original>
